<compile_context>
chip_gen: v5e
topology: v5e:2x2
jax: 0.10.0
libtpu: 0.0.40
codegen_flags: <defaults>
</compile_context>

<pallas_src>
import functools

import jax
import jax.numpy as jnp
from jax.experimental import pallas as pl
from jax.experimental.pallas import tpu as pltpu

ALPHA = 0.25
GAMMA = 2.0      # specialized below as explicit squares (gamma == 2)
EPSILON = 1e-4

_LANES = 128
_DEFAULT_BLOCK_ROWS = 1024   # sweepable; 512-2048 all fit VMEM comfortably
_NCORES = 2                  # v7x megacore split; harmless on v5e/v6e


def _focal_sum_kernel(preds_ref, targets_ref, out_ref, acc_ref, *,
                      n_elems, block_rows, steps_per_core):
    c = pl.program_id(0)          # core-split axis ("parallel")
    i = pl.program_id(1)          # reduction axis  ("arbitrary")

    @pl.when(i == 0)
    def _():
        acc_ref[...] = jnp.zeros_like(acc_ref)

    x = preds_ref[...].astype(jnp.float32)
    t = targets_ref[...].astype(jnp.float32)

    # Global element index of every position in this block -> tail mask.
    step = c * steps_per_core + i                    # logical block index
    base = step * (block_rows * _LANES)
    row_ids = jax.lax.broadcasted_iota(jnp.int32, (block_rows, _LANES), 0)
    col_ids = jax.lax.broadcasted_iota(jnp.int32, (block_rows, _LANES), 1)
    mask = (base + row_ids * _LANES + col_ids) < n_elems

    # exp(-|x|) is reused by both the stable BCE term and the sigmoid.
    e = jnp.exp(-jnp.abs(x))
    # BCEWithLogitsLoss(reduction='none') stable form:
    #   max(x, 0) - x*t + log(1 + exp(-|x|))
    bce = jnp.maximum(x, 0.0) - x * t + jnp.log1p(e)
    # sigmoid(x) = where(x >= 0, 1, e) / (1 + e), then clamp to [eps, 1-eps]
    p = jnp.where(x >= 0.0, 1.0, e) / (1.0 + e)
    p = jnp.clip(p, EPSILON, 1.0 - EPSILON)
    one_m_p = 1.0 - p

    # gamma == 2.0 -> explicit squares (no pow -> no extra EUP exp/log).
    loss = bce * (t * (ALPHA * one_m_p * one_m_p) + (1.0 - t) * (p * p))
    loss = jnp.where(mask, loss, 0.0)

    # Vector accumulate into a vreg-shaped scratch; final reduce in wrapper.
    acc_ref[...] += loss.reshape(block_rows // 8, 8, _LANES).sum(axis=0)

    @pl.when(i == pl.num_programs(1) - 1)
    def _():
        out_ref[...] = acc_ref[...]


def bce_focal_loss(preds, targets, *, block_rows=_DEFAULT_BLOCK_ROWS):
    """BCE focal loss (mean reduction) matching the PyTorch module."""
    assert preds.shape == targets.shape
    n_elems = int(preds.size)

    p_flat = preds.reshape(-1)
    t_flat = targets.reshape(-1)

    rows = pl.cdiv(n_elems, _LANES)
    pad = rows * _LANES - n_elems
    if pad:
        # Only hit when n_elems % 128 != 0; tail is also excluded by the
        # in-kernel index mask.
        p_flat = jnp.pad(p_flat, (0, pad))
        t_flat = jnp.pad(t_flat, (0, pad))
    p2 = p_flat.reshape(rows, _LANES)
    t2 = t_flat.reshape(rows, _LANES)

    # Clamp the block to the (8-row aligned) array size for small inputs.
    blk_rows = max(8, min(block_rows, ((rows + 7) // 8) * 8))

    total_steps = pl.cdiv(rows, blk_rows)
    steps_per_core = pl.cdiv(total_steps, _NCORES)

    def in_map(c, i):
        # Clamp so a core's trailing (fully-masked) steps never DMA past the
        # array; the kernel masks them to zero via the logical index.
        step = jnp.minimum(c * steps_per_core + i, total_steps - 1)
        return (step, 0)

    in_spec = pl.BlockSpec((blk_rows, _LANES), in_map)
    out_spec = pl.BlockSpec((None, 8, _LANES), lambda c, i: (c, 0, 0))

    kernel = functools.partial(
        _focal_sum_kernel,
        n_elems=n_elems,
        block_rows=blk_rows,
        steps_per_core=steps_per_core,
    )

    partials = pl.pallas_call(
        kernel,
        out_shape=jax.ShapeDtypeStruct((_NCORES, 8, _LANES), jnp.float32),
        grid_spec=pltpu.PrefetchScalarGridSpec(
            num_scalar_prefetch=0,
            grid=(_NCORES, steps_per_core),
            in_specs=[in_spec, in_spec],
            out_specs=out_spec,
            scratch_shapes=[pltpu.VMEM((8, _LANES), jnp.float32)],
        ),
        compiler_params=pltpu.CompilerParams(
            dimension_semantics=("parallel", "arbitrary")),
    )(p2, t2)

    # Tiny final reduce of the per-core partial accumulators.
    return (jnp.sum(partials) / jnp.float32(n_elems)).astype(jnp.float32)


def _reference(preds, targets):
    x = preds.astype(jnp.float32)
    t = targets.astype(jnp.float32)
    bce = jnp.maximum(x, 0.0) - x * t + jnp.log1p(jnp.exp(-jnp.abs(x)))
    p = jnp.clip(jax.nn.sigmoid(x), EPSILON, 1.0 - EPSILON)
    loss = t * ALPHA * (1.0 - p) ** GAMMA * bce + (1.0 - t) * p ** GAMMA * bce
    return jnp.mean(loss)


if __name__ == "__main__":
    key = jax.random.PRNGKey(0)
    k1, k2 = jax.random.split(key)
    # NCHW-like small shape: batch=2, channels=4, spatial=16x16
    shape = (2, 4, 16, 16)
    preds = jax.random.normal(k1, shape, dtype=jnp.float32)
    targets = (jax.random.uniform(k2, shape) > 0.5).astype(jnp.float32)

    out = jax.block_until_ready(bce_focal_loss(preds, targets))
    ref = jax.block_until_ready(_reference(preds, targets))
    assert jnp.allclose(out, ref, rtol=1e-5, atol=1e-6), (out, ref)
    print("KERNEL_OK")
</pallas_src>

<mosaic_0001>
module attributes {stable_mosaic.version = 11 : i64} {
  func.func @_focal_sum_kernel(%arg0: i32, %arg1: i32, %arg2: memref<16x128xf32, #tpu.memory_space<vmem>>, %arg3: memref<16x128xf32, #tpu.memory_space<vmem>>, %arg4: memref<1x8x128xf32, #tpu.memory_space<vmem>>, %arg5: memref<8x128xf32, #tpu.memory_space<vmem>>) attributes {dimension_semantics = [#tpu.dimension_semantics<parallel>, #tpu.dimension_semantics<arbitrary>], iteration_bounds = array<i64: 2, 1>, scalar_prefetch = 0 : i64, scratch_operands = 1 : i64, tpu.core_type = #tpu.core_type<tc>, window_params = [{transform_indices = @transform_0, window_bounds = array<i64: 16, 128>}, {transform_indices = @transform_1, window_bounds = array<i64: 16, 128>}, {transform_indices = @transform_2, window_bounds = array<i64: 1, 8, 128>}]} {
    %c0_i32 = arith.constant 0 : i32
    %0 = arith.cmpi eq, %arg1, %c0_i32 : i32
    %1 = arith.extui %0 : i1 to i32
    %c0_i32_0 = arith.constant 0 : i32
    %2 = arith.cmpi ne, %1, %c0_i32_0 : i32
    scf.if %2 {
      %cst_22 = arith.constant 0.000000e+00 : f32
      %60 = vector.broadcast %cst_22 : f32 to vector<8x128xf32>
      %c0_23 = arith.constant 0 : index
      %c0_24 = arith.constant 0 : index
      %61 = vector.load %arg5[%c0_23, %c0_24] : memref<8x128xf32, #tpu.memory_space<vmem>>, vector<8x128xf32>
      tpu.vector_store %arg5[%c0_23, %c0_24], %60 {strides = array<i32>} : memref<8x128xf32, #tpu.memory_space<vmem>>, vector<8x128xf32>,
    } else {
    }
    %c0 = arith.constant 0 : index
    %c0_1 = arith.constant 0 : index
    %3 = vector.load %arg2[%c0, %c0_1] : memref<16x128xf32, #tpu.memory_space<vmem>>, vector<16x128xf32>
    %c0_2 = arith.constant 0 : index
    %c0_3 = arith.constant 0 : index
    %4 = vector.load %arg3[%c0_2, %c0_3] : memref<16x128xf32, #tpu.memory_space<vmem>>, vector<16x128xf32>
    %c1_i32 = arith.constant 1 : i32
    %5 = arith.muli %arg0, %c1_i32 : i32
    %6 = arith.addi %5, %arg1 : i32
    %c2048_i32 = arith.constant 2048 : i32
    %7 = arith.muli %6, %c2048_i32 : i32
    %8 = tpu.iota {dimensions = array<i32: 0>} : vector<16x128xi32>
    %9 = tpu.iota {dimensions = array<i32: 1>} : vector<16x128xi32>
    %c128_i32 = arith.constant 128 : i32
    %10 = vector.broadcast %c128_i32 : i32 to vector<16x128xi32>
    %11 = arith.muli %8, %10 : vector<16x128xi32>
    %12 = vector.broadcast %7 : i32 to vector<16x128xi32>
    %13 = arith.addi %12, %11 : vector<16x128xi32>
    %14 = arith.addi %13, %9 : vector<16x128xi32>
    %c2048_i32_4 = arith.constant 2048 : i32
    %15 = vector.broadcast %c2048_i32_4 : i32 to vector<16x128xi32>
    %16 = arith.cmpi slt, %14, %15 : vector<16x128xi32>
    %17 = math.absf %3 : vector<16x128xf32>
    %cst = arith.constant 0.000000e+00 : f32
    %18 = vector.broadcast %cst : f32 to vector<16x128xf32>
    %19 = arith.subf %18, %17 : vector<16x128xf32>
    %20 = math.exp %19 : vector<16x128xf32>
    %cst_5 = arith.constant 0.000000e+00 : f32
    %21 = vector.broadcast %cst_5 : f32 to vector<16x128xf32>
    %22 = arith.maximumf %3, %21 : vector<16x128xf32>
    %23 = arith.mulf %3, %4 : vector<16x128xf32>
    %24 = arith.subf %22, %23 : vector<16x128xf32>
    %25 = math.log1p %20 : vector<16x128xf32>
    %26 = arith.addf %24, %25 : vector<16x128xf32>
    %cst_6 = arith.constant 0.000000e+00 : f32
    %27 = vector.broadcast %cst_6 : f32 to vector<16x128xf32>
    %28 = arith.cmpf oge, %3, %27 : vector<16x128xf32>
    %cst_7 = arith.constant 1.000000e+00 : f32
    %29 = vector.broadcast %cst_7 : f32 to vector<16x128xf32>
    %30 = arith.select %28, %29, %20 : vector<16x128xi1>, vector<16x128xf32>
    %cst_8 = arith.constant 1.000000e+00 : f32
    %31 = vector.broadcast %cst_8 : f32 to vector<16x128xf32>
    %32 = arith.addf %31, %20 : vector<16x128xf32>
    %33 = arith.divf %30, %32 : vector<16x128xf32>
    %cst_9 = arith.constant 9.99999974E-5 : f32
    %cst_10 = arith.constant 0.999899983 : f32
    %34 = vector.broadcast %cst_9 : f32 to vector<16x128xf32>
    %35 = arith.maximumf %34, %33 : vector<16x128xf32>
    %36 = vector.broadcast %cst_10 : f32 to vector<16x128xf32>
    %37 = arith.minimumf %36, %35 : vector<16x128xf32>
    %cst_11 = arith.constant 1.000000e+00 : f32
    %38 = vector.broadcast %cst_11 : f32 to vector<16x128xf32>
    %39 = arith.subf %38, %37 : vector<16x128xf32>
    %cst_12 = arith.constant 2.500000e-01 : f32
    %40 = vector.broadcast %cst_12 : f32 to vector<16x128xf32>
    %41 = arith.mulf %40, %39 : vector<16x128xf32>
    %42 = arith.mulf %41, %39 : vector<16x128xf32>
    %43 = arith.mulf %4, %42 : vector<16x128xf32>
    %cst_13 = arith.constant 1.000000e+00 : f32
    %44 = vector.broadcast %cst_13 : f32 to vector<16x128xf32>
    %45 = arith.subf %44, %4 : vector<16x128xf32>
    %46 = arith.mulf %37, %37 : vector<16x128xf32>
    %47 = arith.mulf %45, %46 : vector<16x128xf32>
    %48 = arith.addf %43, %47 : vector<16x128xf32>
    %49 = arith.mulf %26, %48 : vector<16x128xf32>
    %cst_14 = arith.constant 0.000000e+00 : f32
    %50 = vector.broadcast %cst_14 : f32 to vector<16x128xf32>
    %51 = arith.select %16, %49, %50 : vector<16x128xi1>, vector<16x128xf32>
    %c0_15 = arith.constant 0 : index
    %c0_16 = arith.constant 0 : index
    %52 = vector.load %arg5[%c0_15, %c0_16] : memref<8x128xf32, #tpu.memory_space<vmem>>, vector<8x128xf32>
    %53 = vector.shape_cast %51 : vector<16x128xf32> to vector<2x8x128xf32>
    %cst_17 = arith.constant dense<0.000000e+00> : vector<8x128xf32>
    %54 = vector.multi_reduction <add>, %53, %cst_17 [0] : vector<2x8x128xf32> to vector<8x128xf32>
    %55 = arith.addf %52, %54 : vector<8x128xf32>
    %c0_18 = arith.constant 0 : index
    %c0_19 = arith.constant 0 : index
    %56 = vector.load %arg5[%c0_18, %c0_19] : memref<8x128xf32, #tpu.memory_space<vmem>>, vector<8x128xf32>
    tpu.vector_store %arg5[%c0_18, %c0_19], %55 {strides = array<i32>} : memref<8x128xf32, #tpu.memory_space<vmem>>, vector<8x128xf32>,
    %c0_i32_20 = arith.constant 0 : i32
    %57 = arith.cmpi eq, %arg1, %c0_i32_20 : i32
    %58 = arith.extui %57 : i1 to i32
    %c0_i32_21 = arith.constant 0 : i32
    %59 = arith.cmpi ne, %58, %c0_i32_21 : i32
    scf.if %59 {
      %c0_22 = arith.constant 0 : index
      %c0_23 = arith.constant 0 : index
      %60 = vector.load %arg5[%c0_22, %c0_23] : memref<8x128xf32, #tpu.memory_space<vmem>>, vector<8x128xf32>
      %c0_24 = arith.constant 0 : index
      %c0_25 = arith.constant 0 : index
      %c0_26 = arith.constant 0 : index
      %61 = vector.load %arg4[%c0_24, %c0_25, %c0_26] : memref<1x8x128xf32, #tpu.memory_space<vmem>>, vector<1x8x128xf32>
      %62 = vector.shape_cast %61 : vector<1x8x128xf32> to vector<8x128xf32>
      %63 = vector.shape_cast %60 : vector<8x128xf32> to vector<1x8x128xf32>
      tpu.vector_store %arg4[%c0_24, %c0_25, %c0_26], %63 {strides = array<i32>} : memref<1x8x128xf32, #tpu.memory_space<vmem>>, vector<1x8x128xf32>,
    } else {
    }
    return
  }
  func.func @transform_0(%arg0: i32, %arg1: i32) -> (i32, i32) {
    %c1_i32 = arith.constant 1 : i32
    %0 = arith.muli %arg0, %c1_i32 : i32
    %1 = arith.addi %0, %arg1 : i32
    %c0_i32 = arith.constant 0 : i32
    %2 = arith.minsi %1, %c0_i32 : i32
    %c0_i32_0 = arith.constant 0 : i32
    %c0_i32_1 = arith.constant 0 : i32
    return %2, %c0_i32_0 : i32, i32
  }
  func.func @transform_1(%arg0: i32, %arg1: i32) -> (i32, i32) {
    %c1_i32 = arith.constant 1 : i32
    %0 = arith.muli %arg0, %c1_i32 : i32
    %1 = arith.addi %0, %arg1 : i32
    %c0_i32 = arith.constant 0 : i32
    %2 = arith.minsi %1, %c0_i32 : i32
    %c0_i32_0 = arith.constant 0 : i32
    %c0_i32_1 = arith.constant 0 : i32
    return %2, %c0_i32_0 : i32, i32
  }
  func.func @transform_2(%arg0: i32, %arg1: i32) -> (i32, i32, i32) {
    %c0_i32 = arith.constant 0 : i32
    %c0_i32_0 = arith.constant 0 : i32
    %c0_i32_1 = arith.constant 0 : i32
    return %arg0, %c0_i32, %c0_i32_0 : i32, i32, i32
  }
}

</mosaic_0001>

<llo_original>
// kernel: tpu_custom_call.1
$region0: #{tpu_custom_call.1}
  #allocation0 [shape = 'u32[]', space=smem, size = 0x4, offset = 0x4, fixed_abs, tag = 'smem constant byte address 0x4 - core index']
  #allocation1 [shape = 'u32[72,128]{1,0:T(1,128)}', space=vmem, size = 0x9000, scoped, tag = 'internal scratch']
  #allocation2 [shape = 'f32[8,128]{1,0:T(8,128)}', space=vmem, size = 0x1000, scoped, tag = 'scratch operand']
  %s0 = inlined_call_operand.hbm [shape: f32[16,128], index: 0, kind: input, shape index: {}]
  %s1 = inlined_call_operand.hbm [shape: f32[16,128], index: 1, kind: input, shape index: {}]
  %s2 = inlined_call_operand.hbm [shape: f32[2,8,128], index: 2, kind: output, shape index: {}]
  %s3 = sld [smem:[#allocation0]]
  $region57: #{tpu_custom_call.1} parent=0
    _
  %s5 = ssub.s32 1, %s3
  %s6 = scalar_select 0, %s5, %s3
  $region1: #{tpu_custom_call.1} parent=0
    #allocation3 [shape = 'u8[16384]{0}', space=vmem, size = 0x4000, scoped, tag = 'input window, operand 0']
    #allocation4 [shape = 's32[2]{0}', space=sflag, size = 0x8, scoped, tag = 'scoped memory for tpu_custom_call.1']
    #allocation5 [shape = 's32[2]{0}', space=sflag, size = 0x8, scoped, tag = 'scoped memory for tpu_custom_call.1']
    #allocation6 [shape = 'u8[16384]{0}', space=vmem, size = 0x4000, scoped, tag = 'input window, operand 1']
    #allocation7 [shape = 's32[2]{0}', space=sflag, size = 0x8, scoped, tag = 'scoped memory for tpu_custom_call.1']
    #allocation8 [shape = 'u8[8192]{0}', space=vmem, size = 0x2000, scoped, tag = 'output window, operand 0']
    %7 = vsyncpa [#allocation4], 0
    %s8 = scalar_lea.sflag [#allocation4], 1
    %9 = vsyncpa %s8, 0
    %10 = vsyncpa [#allocation7], 0
    %s11 = scalar_lea.sflag [#allocation7], 1
    %12 = vsyncpa %s11, 0
    %13 = vsyncpa [#allocation5], 0
    %s14 = scalar_lea.sflag [#allocation5], 1
    %15 = vsyncpa %s14, 0
    loop: start=0, step=1, limit=4
    $region2: #{tpu_custom_call.1} parent=1 // loop_pre_header
      _
    $region3: #{tpu_custom_call.1} parent=1 // loop_header
      %s17 = sphi 0, %s21
      %p18 = scmp.ge.s32.totalorder %s17, 4
      %s24 = sphi 0, %s36
      %s25 = sphi 0, %s32
      %s26 = sphi 0, %s24
      %s27 = sphi 0, %s25
      %s28 = sphi 0, %s26
      %s29 = sphi 0, %s27
      %s45 = sphi 0, %s47
      %s48 = sphi 0, %s45
      %s49 = sphi 0, %s48
      %s65 = sphi 0, %s49
      %s77 = sphi 0, %s79
      %s80 = sphi 0, %s77
      %s81 = sphi 0, %s80
      %s97 = sphi 0, %s81
      %s103 = sphi 0, %s105
      %s106 = sphi 0, %s103
      %s107 = sphi 0, %s106
      %s123 = sphi 0, %s107
    $region4: #{tpu_custom_call.1} parent=1 // loop_header_branch
      %20 = sbr.rel (%p18) target = $region8
    $region5: #{tpu_custom_call.1} parent=1 // loop_body
      %s22 = ssub.s32 %s17, 1
      %s23 = ssub.s32 %s17, 2
      %s30 = sadd.s32 1, %s25
      %p31 = scmp.ge.s32.totalorder %s30, 1
      %s32 = scalar_select %p31, 0, %s30
      %s33 = sadd.s32 1, %s24
      %s34 = scalar_select %p31, %s33, %s24
      %p35 = scmp.ge.s32.totalorder %s34, 2
      %s36 = scalar_select %p35, 0, %s34
      %s37 = sadd.s32 %s24, %s25
      %p38 = scmp.lt.s32.totalorder %s37, 0
      %s39 = scalar_select %p38, %s37, 0
      %s40 = sadd.s32 %s36, %s32
      %p41 = scmp.lt.s32.totalorder %s40, 0
      %s42 = scalar_select %p41, %s40, 0
      %s43 = ssub.s32 %s39, %s42
      %p44 = scmp.eq.s32.totalorder %s43, 0
      %s46 = sadd.s32 %s45, 1
      %s47 = scalar_select %p44, %s45, %s46
      %p50 = pneg %p44
      %p51 = scmp.eq.s32.totalorder %s17, 1
      %p52 = por %p50, %p51
      %p53 = scmp.ne.s32.totalorder %s45, %s48
      %p54 = scmp.eq.s32.totalorder %s17, 0
      %p55 = por %p53, %p54
      %p56 = scmp.ne.s32.totalorder %s45, %s48
      %p57 = scmp.eq.s32.totalorder %s22, 1
      %p58 = por %p56, %p57
      %p59 = scmp.ne.s32.totalorder %s48, %s49
      %p60 = scmp.eq.s32.totalorder %s22, 0
      %p61 = por %p59, %p60
      %p62 = scmp.ne.s32.totalorder %s48, %s49
      %p63 = scmp.eq.s32.totalorder %s23, 1
      %p64 = por %p62, %p63
      %p66 = scmp.ne.s32.totalorder %s49, %s65
      %p67 = scmp.eq.s32.totalorder %s23, 0
      %p68 = por %p66, %p67
      %s69 = sadd.s32 %s24, %s25
      %p70 = scmp.lt.s32.totalorder %s69, 0
      %s71 = scalar_select %p70, %s69, 0
      %s72 = sadd.s32 %s36, %s32
      %p73 = scmp.lt.s32.totalorder %s72, 0
      %s74 = scalar_select %p73, %s72, 0
      %s75 = ssub.s32 %s71, %s74
      %p76 = scmp.eq.s32.totalorder %s75, 0
      %s78 = sadd.s32 %s77, 1
      %s79 = scalar_select %p76, %s77, %s78
      %p82 = pneg %p76
      %p83 = scmp.eq.s32.totalorder %s17, 1
      %p84 = por %p82, %p83
      %p85 = scmp.ne.s32.totalorder %s77, %s80
      %p86 = scmp.eq.s32.totalorder %s17, 0
      %p87 = por %p85, %p86
      %p88 = scmp.ne.s32.totalorder %s77, %s80
      %p89 = scmp.eq.s32.totalorder %s22, 1
      %p90 = por %p88, %p89
      %p91 = scmp.ne.s32.totalorder %s80, %s81
      %p92 = scmp.eq.s32.totalorder %s22, 0
      %p93 = por %p91, %p92
      %p94 = scmp.ne.s32.totalorder %s80, %s81
      %p95 = scmp.eq.s32.totalorder %s23, 1
      %p96 = por %p94, %p95
      %p98 = scmp.ne.s32.totalorder %s81, %s97
      %p99 = scmp.eq.s32.totalorder %s23, 0
      %p100 = por %p98, %p99
      %s101 = ssub.s32 %s24, %s36
      %p102 = scmp.eq.s32.totalorder %s101, 0
      %s104 = sadd.s32 %s103, 1
      %s105 = scalar_select %p102, %s103, %s104
      %p108 = pneg %p102
      %p109 = scmp.eq.s32.totalorder %s17, 1
      %p110 = por %p108, %p109
      %p111 = scmp.ne.s32.totalorder %s103, %s106
      %p112 = scmp.eq.s32.totalorder %s17, 0
      %p113 = por %p111, %p112
      %p114 = scmp.ne.s32.totalorder %s103, %s106
      %p115 = scmp.eq.s32.totalorder %s22, 1
      %p116 = por %p114, %p115
      %p117 = scmp.ne.s32.totalorder %s106, %s107
      %p118 = scmp.eq.s32.totalorder %s22, 0
      %p119 = por %p117, %p118
      %p120 = scmp.ne.s32.totalorder %s106, %s107
      %p121 = scmp.eq.s32.totalorder %s23, 1
      %p122 = por %p120, %p121
      %p124 = scmp.ne.s32.totalorder %s107, %s123
      %p125 = scmp.eq.s32.totalorder %s23, 0
      %p126 = por %p124, %p125
      %p127 = scmp.le.s32.totalorder 1, %s17
      %p128 = scmp.lt.s32.totalorder %s17, 3
      %p129 = pnand %p127, %p128
      %p130 = pneg %p129
      // Predicated region
      $region9: #{tpu_custom_call.1} parent=5 // pred_check
        _
      $region10: #{tpu_custom_call.1} parent=5 // pred_check_branch
        %132 = sbr.rel (%p129) target = $region12
      $region11: #{tpu_custom_call.1} parent=5 // pred_region
        %s133 = ssub.s32 %s17, 1
      $region12: #{tpu_custom_call.1} parent=5 // pred_fallthru
        _
      %p134 = scmp.lt.s32.totalorder %s17, 2
      // Predicated region
      $region13: #{tpu_custom_call.1} parent=5 // pred_check
        %p135 = pneg %p134
      $region14: #{tpu_custom_call.1} parent=5 // pred_check_branch
        %137 = sbr.rel (%p135) target = $region16
      $region15: #{tpu_custom_call.1} parent=5 // pred_region
        // Predicated region
        $region17: #{tpu_custom_call.1} parent=15 // pred_check
          %p138 = pneg %p55
        $region18: #{tpu_custom_call.1} parent=15 // pred_check_branch
          %140 = sbr.rel (%p138) target = $region20
        $region19: #{tpu_custom_call.1} parent=15 // pred_region
          %s141 = sand.u32 %s45, 1
          %s142 = scalar_lea.sflag [#allocation4], %s141
          %s143 = sand.u32 %s45, 1
          %s144 = smul.addr %s143, 16
          %s145 = scalar_lea.vmem [#allocation3], %s144
          %s146 = sadd.s32 %s24, %s25
          %p147 = scmp.lt.s32.totalorder %s146, 0
          %s148 = scalar_select %p147, %s146, 0
          %s149 = smul.u32 2, %s148
          %151 = vsyncadd %s142, 0
          %s152 = smul.addr %s149, 8
          %s153 = scalar_lea.hbm %s0, %s152
          %s154 = sshll.u32 %s153, 4
          %s155 = int_to_ptr.hbm [resolvable:$true] %s154
          %s156 = sshll.u32 %s145, 4
          %s157 = int_to_ptr.vmem [resolvable:$true] %s156
          %162 = dma.hbm_to_vmem [thread:$0]  %s155, 256, %s157, %s142, 128, 128, 8
        $region20: #{tpu_custom_call.1} parent=15 // pred_fallthru
          _
        // Predicated region
        $region21: #{tpu_custom_call.1} parent=15 // pred_check
          %p163 = pneg %p87
        $region22: #{tpu_custom_call.1} parent=15 // pred_check_branch
          %165 = sbr.rel (%p163) target = $region24
        $region23: #{tpu_custom_call.1} parent=15 // pred_region
          %s166 = sand.u32 %s77, 1
          %s167 = scalar_lea.sflag [#allocation7], %s166
          %s168 = sand.u32 %s77, 1
          %s169 = smul.addr %s168, 16
          %s170 = scalar_lea.vmem [#allocation6], %s169
          %s171 = sadd.s32 %s24, %s25
          %p172 = scmp.lt.s32.totalorder %s171, 0
          %s173 = scalar_select %p172, %s171, 0
          %s174 = smul.u32 2, %s173
          %176 = vsyncadd %s167, 0
          %s177 = smul.addr %s174, 8
          %s178 = scalar_lea.hbm %s1, %s177
          %s179 = sshll.u32 %s178, 4
          %s180 = int_to_ptr.hbm [resolvable:$true] %s179
          %s181 = sshll.u32 %s170, 4
          %s182 = int_to_ptr.vmem [resolvable:$true] %s181
          %187 = dma.hbm_to_vmem [thread:$0]  %s180, 256, %s182, %s167, 128, 128, 8
        $region24: #{tpu_custom_call.1} parent=15 // pred_fallthru
          _
      $region16: #{tpu_custom_call.1} parent=5 // pred_fallthru
        _
      %p188 = scmp.le.s32.totalorder 1, %s17
      %p189 = scmp.lt.s32.totalorder %s17, 3
      %p190 = pnand %p188, %p189
      %p191 = pneg %p190
      // Predicated region
      $region25: #{tpu_custom_call.1} parent=5 // pred_check
        _
      $region26: #{tpu_custom_call.1} parent=5 // pred_check_branch
        %193 = sbr.rel (%p190) target = $region28
      $region27: #{tpu_custom_call.1} parent=5 // pred_region
        %s194 = ssub.s32 %s17, 1
        %s195 = sand.u32 %s48, 1
        %s196 = scalar_lea.sflag [#allocation4], %s195
        %s197 = sand.u32 %s48, 1
        %s198 = smul.addr %s197, 16
        %s199 = scalar_lea.vmem [#allocation3], %s198
        // Predicated region
        $region29: #{tpu_custom_call.1} parent=27 // pred_check
          %p200 = pneg %p61
        $region30: #{tpu_custom_call.1} parent=27 // pred_check_branch
          %202 = sbr.rel (%p200) target = $region32
        $region31: #{tpu_custom_call.1} parent=27 // pred_region
          %204 = dma.done %s196, 256
        $region32: #{tpu_custom_call.1} parent=27 // pred_fallthru
          _
        %s205 = sand.u32 %s80, 1
        %s206 = scalar_lea.sflag [#allocation7], %s205
        %s207 = sand.u32 %s80, 1
        %s208 = smul.addr %s207, 16
        %s209 = scalar_lea.vmem [#allocation6], %s208
        // Predicated region
        $region33: #{tpu_custom_call.1} parent=27 // pred_check
          %p210 = pneg %p93
        $region34: #{tpu_custom_call.1} parent=27 // pred_check_branch
          %212 = sbr.rel (%p210) target = $region36
        $region35: #{tpu_custom_call.1} parent=27 // pred_region
          %214 = dma.done %s206, 256
        $region36: #{tpu_custom_call.1} parent=27 // pred_fallthru
          _
        %s215 = sand.u32 %s48, 1
        %s216 = scalar_lea.sflag [#allocation4], %s215
        %s217 = sand.u32 %s48, 1
        %s218 = smul.addr %s217, 16
        %s219 = scalar_lea.vmem [#allocation3], %s218
        %p220 = pneg %p61
        %p221 = pneg %p58
        %s222 = sand.u32 %s80, 1
        %s223 = scalar_lea.sflag [#allocation7], %s222
        %s224 = sand.u32 %s80, 1
        %s225 = smul.addr %s224, 16
        %s226 = scalar_lea.vmem [#allocation6], %s225
        %p227 = pneg %p93
        %p228 = pneg %p90
        %p229 = pneg %p119
        %p230 = pneg %p116
        %s231 = sand.u32 %s106, 1
        %s232 = scalar_lea.sflag [#allocation5], %s231
        %s233 = sand.u32 %s106, 1
        %s234 = smul.addr %s233, 8
        %s235 = scalar_lea.vmem [#allocation8], %s234
        %s236 = sadd.s32 %s26, %s27
        %p237 = scmp.lt.s32.totalorder %s236, 0
        %s238 = scalar_select %p237, %s236, 0
        %s239 = smul.u32 2, %s238
        %s240 = sadd.s32 %s26, %s27
        %p241 = scmp.lt.s32.totalorder %s240, 0
        %s242 = scalar_select %p241, %s240, 0
        %s243 = smul.u32 2, %s242
        %p244 = scmp.eq.s32.totalorder %s27, 0
        // Predicated region
        $region37: #{tpu_custom_call.1} parent=27 // pred_check
          %p245 = pneg %p244
        $region38: #{tpu_custom_call.1} parent=27 // pred_check_branch
          %247 = sbr.rel (%p245) target = $region40
        $region39: #{tpu_custom_call.1} parent=27 // pred_region
          %248 = vst [vmem:[#allocation2] sm:$0xff] 0.0
        $region40: #{tpu_custom_call.1} parent=27 // pred_fallthru
          _
        %v249 = vld [vmem:[%s199] sm:$0xff]
        %v250 = vld [vmem:[%s199 + $0x8] sm:$0xff]
        %v251 = vld [vmem:[%s209] sm:$0xff]
        %v252 = vld [vmem:[%s209 + $0x8] sm:$0xff]
        %s253 = sadd.s32 %s26, %s27
        %s254 = smul.u32 %s253, 2048
        %v255 = vlaneseq
        %v256 = vshrl.u32 %v255, 7
        %v257 = vadd.s32 %v256, 8
        %v258 = vlaneseq
        %v259 = vand.u32 %v258, 127
        %v260 = vmul.u32 %v256, 128
        %v261 = vmul.u32 %v257, 128
        %v262 = vstv %s254
        %v263 = vadd.s32 %v262, %v260
        %v264 = vadd.s32 %v262, %v261
        %v265 = vadd.s32 %v263, %v259
        %v266 = vadd.s32 %v264, %v259
        %vm267 = vcmp.lt.s32.totalorder %v265, 2048
        %vm268 = vcmp.lt.s32.totalorder %v266, 2048
        %v269 = vand.u32 2147483647, %v249
        %v270 = vand.u32 2147483647, %v250
        %v271 = vsub.f32 0.0, %v269
        %v272 = vsub.f32 0.0, %v270
        %v273 = vmul.f32 %v271, 1.442695
        %v274 = vpow.pop %v273
        %v275 = vmul.f32 %v272, 1.442695
        %v276 = vpow.pop %v275
        %v277 = vmax.f32 %v249, 0.0
        %v278 = vmax.f32 %v250, 0.0
        %v279 = vmul.f32 %v249, %v251
        %v280 = vmul.f32 %v250, %v252
        %v281 = vsub.f32 %v277, %v279
        %v282 = vsub.f32 %v278, %v280
        %v283 = vadd.f32 %v274, 1.0
        %v284 = vlog2.pop %v283
        %v285 = vmul.f32 %v284, 0.6931472
        %v286 = vmul.f32 -0.5, %v274
        %v287 = vadd.f32 %v286, 1.0
        %v288 = vmul.f32 %v287, %v274
        %v289 = vand.u32 2147483647, %v274
        %vm290 = vcmp.lt.f32.partialorder %v289, 0.0004427343
        %v291 = vsel %vm290, %v288, %v285
        %v292 = vadd.f32 %v276, 1.0
        %v293 = vlog2.pop %v292
        %v294 = vmul.f32 %v293, 0.6931472
        %v295 = vmul.f32 -0.5, %v276
        %v296 = vadd.f32 %v295, 1.0
        %v297 = vmul.f32 %v296, %v276
        %v298 = vand.u32 2147483647, %v276
        %vm299 = vcmp.lt.f32.partialorder %v298, 0.0004427343
        %v300 = vsel %vm299, %v297, %v294
        %v301 = vadd.f32 %v281, %v291
        %v302 = vadd.f32 %v282, %v300
        %vm303 = vcmp.ge.f32.partialorder %v249, 0.0
        %vm304 = vcmp.ge.f32.partialorder %v250, 0.0
        %v305 = vsel %vm303, 1.0, %v274
        %v306 = vsel %vm304, 1.0, %v276
        %v307 = vadd.f32 %v274, 1.0
        %v308 = vadd.f32 %v276, 1.0
        %v309 = vrcp.pop %v307
        %v310 = vmul.f32 %v307, %v309
        %v311 = vsub.f32 1.0, %v310
        %v312 = vmul.f32 %v309, %v311
        %v313 = vadd.f32 %v309, %v312
        %vm314 = vweird.f32 %v307
        %vm315 = vweird.f32 %v309
        %vm316 = vmor %vm314, %vm315
        %v317 = vsel %vm316, %v309, %v313
        %v318 = vand.u32 2147483647, %v307
        %vm319 = vcmp.eq.f32.partialorder %v318, 8.507059e+37
        %v320 = vand.u32 %v307, 2147483648
        %v321 = vor.u32 1.1754944e-38, %v320
        %v322 = vsel %vm319, %v321, %v317
        %v323 = vmul.f32 %v305, %v322
        %v324 = vrcp.pop %v308
        %v325 = vmul.f32 %v308, %v324
        %v326 = vsub.f32 1.0, %v325
        %v327 = vmul.f32 %v324, %v326
        %v328 = vadd.f32 %v324, %v327
        %vm329 = vweird.f32 %v308
        %vm330 = vweird.f32 %v324
        %vm331 = vmor %vm329, %vm330
        %v332 = vsel %vm331, %v324, %v328
        %v333 = vand.u32 2147483647, %v308
        %vm334 = vcmp.eq.f32.partialorder %v333, 8.507059e+37
        %v335 = vand.u32 %v308, 2147483648
        %v336 = vor.u32 1.1754944e-38, %v335
        %v337 = vsel %vm334, %v336, %v332
        %v338 = vmul.f32 %v306, %v337
        %v339 = vmax.f32 %v323, 0.0001
        %v340 = vmax.f32 %v338, 0.0001
        %v341 = vmin.f32 %v339, 0.9999
        %v342 = vmin.f32 %v340, 0.9999
        %v343 = vsub.f32 1.0, %v341
        %v344 = vsub.f32 1.0, %v342
        %v345 = vmul.f32 %v343, 0.25
        %v346 = vmul.f32 %v344, 0.25
        %v347 = vmul.f32 %v345, %v343
        %v348 = vmul.f32 %v346, %v344
        %v349 = vmul.f32 %v251, %v347
        %v350 = vmul.f32 %v252, %v348
        %v351 = vsub.f32 1.0, %v251
        %v352 = vsub.f32 1.0, %v252
        %v353 = vmul.f32 %v341, %v341
        %v354 = vmul.f32 %v342, %v342
        %v355 = vmul.f32 %v351, %v353
        %v356 = vmul.f32 %v352, %v354
        %v357 = vadd.f32 %v349, %v355
        %v358 = vadd.f32 %v350, %v356
        %v359 = vmul.f32 %v301, %v357
        %v360 = vmul.f32 %v302, %v358
        %v361 = vsel %vm267, %v359, 0.0
        %v362 = vsel %vm268, %v360, 0.0
        %v363 = vld [vmem:[#allocation2] sm:$0xff]
        %v364 = vadd.f32 %v361, %v362
        %v365 = vadd.f32 %v363, %v364
        %366 = vst [vmem:[#allocation2] sm:$0xff] %v365
        // Predicated region
        $region41: #{tpu_custom_call.1} parent=27 // pred_check
          %p367 = pneg %p244
        $region42: #{tpu_custom_call.1} parent=27 // pred_check_branch
          %369 = sbr.rel (%p367) target = $region44
        $region43: #{tpu_custom_call.1} parent=27 // pred_region
          %v370 = vld [vmem:[#allocation2] sm:$0xff]
          %371 = vst [vmem:[%s235] sm:$0xff] %v370
        $region44: #{tpu_custom_call.1} parent=27 // pred_fallthru
          _
        %s372 = sand.u32 %s106, 1
        %s373 = scalar_lea.sflag [#allocation5], %s372
        %s374 = sand.u32 %s106, 1
        %s375 = smul.addr %s374, 8
        %s376 = scalar_lea.vmem [#allocation8], %s375
        // Predicated region
        $region45: #{tpu_custom_call.1} parent=27 // pred_check
          %p377 = pneg %p116
        $region46: #{tpu_custom_call.1} parent=27 // pred_check_branch
          %379 = sbr.rel (%p377) target = $region48
        $region47: #{tpu_custom_call.1} parent=27 // pred_region
          %381 = vsyncadd %s373, 0
          %s382 = smul.addr %s26, 8
          %s383 = scalar_lea.hbm %s2, %s382
          %s385 = sshll.u32 %s376, 4
          %s386 = int_to_ptr.vmem [resolvable:$true] %s385
          %s387 = sshll.u32 %s383, 4
          %s388 = int_to_ptr.hbm [resolvable:$true] %s387
          %390 = dma.vmem_to_hbm [thread:$0]  %s386, 128, %s388, %s373
        $region48: #{tpu_custom_call.1} parent=27 // pred_fallthru
          _
      $region28: #{tpu_custom_call.1} parent=5 // pred_fallthru
        _
      %p391 = scmp.le.s32.totalorder 2, %s17
      // Predicated region
      $region49: #{tpu_custom_call.1} parent=5 // pred_check
        %p392 = pneg %p391
      $region50: #{tpu_custom_call.1} parent=5 // pred_check_branch
        %394 = sbr.rel (%p392) target = $region52
      $region51: #{tpu_custom_call.1} parent=5 // pred_region
        %s395 = ssub.s32 %s17, 2
        // Predicated region
        $region53: #{tpu_custom_call.1} parent=51 // pred_check
          %p396 = pneg %p122
        $region54: #{tpu_custom_call.1} parent=51 // pred_check_branch
          %398 = sbr.rel (%p396) target = $region56
        $region55: #{tpu_custom_call.1} parent=51 // pred_region
          %s399 = sand.u32 %s107, 1
          %s400 = scalar_lea.sflag [#allocation5], %s399
          %s401 = sand.u32 %s107, 1
          %s402 = smul.addr %s401, 8
          %s403 = scalar_lea.vmem [#allocation8], %s402
          %405 = dma.done %s400, 128
        $region56: #{tpu_custom_call.1} parent=51 // pred_fallthru
          _
      $region52: #{tpu_custom_call.1} parent=5 // pred_fallthru
        _
    $region6: #{tpu_custom_call.1} parent=1 // loop_footer
      %s21 = sadd.s32 1, %s17
    $region7: #{tpu_custom_call.1} parent=1 // loop_footer_branch
      %16 = sbr.rel target = $region3
    $region8: #{tpu_custom_call.1} parent=1 // loop_exit
      _
    %406 = vsyncpa [#allocation4], 1
    %s407 = scalar_lea.sflag [#allocation4], 1
    %408 = vsyncpa %s407, 1
    %409 = vsyncpa [#allocation7], 1
    %s410 = scalar_lea.sflag [#allocation7], 1
    %411 = vsyncpa %s410, 1
    %412 = vsyncpa [#allocation5], 1
    %s413 = scalar_lea.sflag [#allocation5], 1
    %414 = vsyncpa %s413, 1

</llo_original>
